<compile_context>
chip_gen: v6e
topology: v6e:2x2x1
jax: 0.10.0
libtpu: 0.0.40
codegen_flags: <defaults>
</compile_context>

<pallas_src>
import jax
import jax.numpy as jnp
from jax import lax
from jax.experimental import pallas as pl
from jax.experimental.pallas import tpu as pltpu


# ----------------------------------------------------------------------------
# Kernel 1: hoisted input projection for a whole layer / sequence.
#   (S*B, I) @ (I, 3H) + (1, 3H)  -- one MXU-friendly matmul instead of 3*S
#   tiny per-timestep matmuls on the serial critical path.
# ----------------------------------------------------------------------------
def proj_kernel(x_ref, w_ref, b_ref, o_ref):
    o_ref[...] = (
        jnp.dot(x_ref[...], w_ref[...], preferred_element_type=jnp.float32)
        + b_ref[...]
    )


def input_projection(x, w_all, b_all):
    """x: (S, B, I) -> (S, B, 3H) gate pre-activations, biases folded in."""
    S, B, I = x.shape
    N = w_all.shape[1]
    xm = x.reshape(S * B, I)
    # Small shapes: single block, fully resident in VMEM (single-buffered).
    # For large S*B one would tile the M dimension with a grid.
    out = pl.pallas_call(
        proj_kernel,
        out_shape=jax.ShapeDtypeStruct((S * B, N), jnp.float32),
    )(xm, w_all, b_all)
    return out.reshape(S, B, N)


# ----------------------------------------------------------------------------
# Kernel 2: the recurrence. grid = (num_time_chunks,), serial ("arbitrary").
# Each grid step processes a whole time chunk with an in-kernel fori_loop,
# carrying the hidden state in a VMEM scratch buffer across chunks. Per step
# only the h-dependent work remains: one fused h @ [Uz|Ur] matmul plus the
# dependent (r*h) @ Uh matmul; x-projection and biases are precomputed.
# ----------------------------------------------------------------------------
def gru_recurrent_kernel(xproj_ref, h0_ref, uzr_ref, uh_ref, out_ref, h_scratch):
    H = h0_ref.shape[1]
    T = out_ref.shape[0]          # timesteps in this chunk (static)

    @pl.when(pl.program_id(0) == 0)
    def _():
        h_scratch[...] = h0_ref[...]

    # Weights stay resident in VMEM for the whole chunk (loaded once, hoisted
    # out of the time loop).
    u_zr = uzr_ref[...]           # (H, 2H) = [Uz | Ur]
    u_h = uh_ref[...]             # (H, H)

    def step(t, h):
        a = xproj_ref[t]          # (B, 3H) precomputed x-projection (+ folded biases)
        zr = jax.nn.sigmoid(
            a[:, :2 * H]
            + jnp.dot(h, u_zr, preferred_element_type=jnp.float32))
        z = zr[:, :H]
        r = zr[:, H:]
        h_tilde = jnp.tanh(
            a[:, 2 * H:]
            + jnp.dot(r * h, u_h, preferred_element_type=jnp.float32))
        h_new = (1.0 - z) * h + z * h_tilde
        out_ref[t] = h_new
        return h_new

    # Carry h through the in-kernel loop; persist across chunks via scratch.
    h_scratch[...] = lax.fori_loop(0, T, step, h_scratch[...], unroll=(T <= 16))


def _pick_time_chunk(S, max_chunk=128):
    """Largest divisor of S that is <= max_chunk (coarse time-chunking)."""
    for c in range(min(S, max_chunk), 0, -1):
        if S % c == 0:
            return c
    return 1


def gru_recurrent(xproj, h0, u_zr, u_h):
    """xproj: (S, B, 3H) pre-activations; h0: (B, H). Returns all hidden states (S, B, H)."""
    S, B, H3 = xproj.shape
    H = h0.shape[-1]
    T = _pick_time_chunk(S)
    num_chunks = S // T

    grid_spec = pltpu.PrefetchScalarGridSpec(
        num_scalar_prefetch=0,
        grid=(num_chunks,),
        in_specs=[
            pl.BlockSpec((T, B, H3), lambda c: (c, 0, 0)),   # time chunk of pre-activations
            pl.BlockSpec((B, H), lambda c: (0, 0)),          # h0 (constant block index)
            pl.BlockSpec((H, 2 * H), lambda c: (0, 0)),      # [Uz|Ur], resident weights
            pl.BlockSpec((H, H), lambda c: (0, 0)),          # Uh, resident weights
        ],
        out_specs=pl.BlockSpec((T, B, H), lambda c: (c, 0, 0)),
        scratch_shapes=[pltpu.VMEM((B, H), jnp.float32)],    # carried hidden state
    )
    # NOTE: at realistic H one would cast the U matrices to bf16 (v6e/v7x MXU)
    # and/or single-buffer the constant weight blocks to halve weight VMEM;
    # kept f32 + defaults here for the tight reference tolerance / toy sizes.
    return pl.pallas_call(
        gru_recurrent_kernel,
        out_shape=jax.ShapeDtypeStruct((S, B, H), jnp.float32),
        grid_spec=grid_spec,
        compiler_params=pltpu.CompilerParams(
            dimension_semantics=("arbitrary",)),             # time is a serial recurrence
    )(xproj, h0, u_zr, u_h)


# ----------------------------------------------------------------------------
# Parameter init (deterministic, PyTorch nn.Linear-style uniform(-k, k)).
# Weights kept pre-transposed: shape (in_features, out_features).
# ----------------------------------------------------------------------------
def init_linear(key, in_features, out_features):
    k = 1.0 / jnp.sqrt(jnp.float32(in_features))
    kw, kb = jax.random.split(key)
    w = jax.random.uniform(kw, (in_features, out_features), jnp.float32, -k, k)
    b = jax.random.uniform(kb, (1, out_features), jnp.float32, -k, k)
    return w, b


def init_gru_params(key, input_size, hidden_dim, num_layers):
    params = []
    for layer in range(num_layers):
        in_sz = input_size if layer == 0 else hidden_dim
        keys = jax.random.split(jax.random.fold_in(key, layer), 6)
        wz, bz = init_linear(keys[0], in_sz, hidden_dim)
        uz, buz = init_linear(keys[1], hidden_dim, hidden_dim)
        wr, br = init_linear(keys[2], in_sz, hidden_dim)
        ur, bur = init_linear(keys[3], hidden_dim, hidden_dim)
        wh, bh = init_linear(keys[4], in_sz, hidden_dim)
        uh, buh = init_linear(keys[5], hidden_dim, hidden_dim)
        params.append((wz, uz, wr, ur, wh, uh, bz, buz, br, bur, bh, buh))
    return params


def fuse_layer_params(p):
    """Fuse one layer's raw params for the kernels (fold biases, concat gates)."""
    wz, uz, wr, ur, wh, uh, bz, buz, br, bur, bh, buh = p
    w_all = jnp.concatenate([wz, wr, wh], axis=1)                     # (in, 3H)
    b_all = jnp.concatenate([bz + buz, br + bur, bh + buh], axis=1)   # (1, 3H)
    u_zr = jnp.concatenate([uz, ur], axis=1)                          # (H, 2H)
    return w_all, b_all, u_zr, uh


# ----------------------------------------------------------------------------
# MyGRU forward (matches the PyTorch module semantics).
# ----------------------------------------------------------------------------
def my_gru_forward(x, fused_params, hidden_dim, h0=None, batch_first=False):
    if batch_first:
        x = jnp.transpose(x, (1, 0, 2))
    S, B, _ = x.shape
    L = len(fused_params)
    if h0 is None:
        h0 = jnp.zeros((L, B, hidden_dim), jnp.float32)

    layer_in = x
    h_lasts = []
    for layer in range(L):
        w_all, b_all, u_zr, u_h = fused_params[layer]
        # Hoisted input projection: one big matmul per layer (off the recurrence).
        xproj = input_projection(layer_in, w_all, b_all)
        out = gru_recurrent(xproj, h0[layer], u_zr, u_h)
        h_lasts.append(out[-1])          # final hidden state (no extra kernel output)
        layer_in = out
    outputs = layer_in
    hx = jnp.stack(h_lasts)
    if batch_first:
        outputs = jnp.transpose(outputs, (1, 0, 2))
    return outputs, hx
    # TODO(synk): for production shapes, fuse the layer loop into one kernel (or a
    # layer-time wavefront) to avoid the HBM round trip of (S,B,H) activations.


# ----------------------------------------------------------------------------
# Pure-JAX reference (for correctness checking only) -- uses the raw params.
# ----------------------------------------------------------------------------
def gru_reference(x, params_per_layer, hidden_dim, h0=None, batch_first=False):
    if batch_first:
        x = jnp.transpose(x, (1, 0, 2))
    S, B, _ = x.shape
    L = len(params_per_layer)
    if h0 is None:
        h0 = jnp.zeros((L, B, hidden_dim), jnp.float32)
    hx = [h0[l] for l in range(L)]
    outputs = []
    for t in range(S):
        x_t = x[t]
        for layer in range(L):
            wz, uz, wr, ur, wh, uh, bz, buz, br, bur, bh, buh = params_per_layer[layer]
            h = hx[layer]
            z = jax.nn.sigmoid(x_t @ wz + bz + h @ uz + buz)
            r = jax.nn.sigmoid(x_t @ wr + br + h @ ur + bur)
            h_tilde = jnp.tanh(x_t @ wh + bh + (r * h) @ uh + buh)
            h_t = (1 - z) * h + z * h_tilde
            hx[layer] = h_t
            x_t = h_t
        outputs.append(x_t)
    outputs = jnp.stack(outputs)
    if batch_first:
        outputs = jnp.transpose(outputs, (1, 0, 2))
    return outputs, jnp.stack(hx)


if __name__ == "__main__":
    SEQ, BATCH, INPUT, HIDDEN, LAYERS = 8, 4, 16, 32, 2

    key = jax.random.PRNGKey(0)
    kx, kp = jax.random.split(key)
    x = jax.random.normal(kx, (SEQ, BATCH, INPUT), dtype=jnp.float32)
    raw_params = init_gru_params(kp, INPUT, HIDDEN, LAYERS)
    fused_params = [fuse_layer_params(p) for p in raw_params]

    outputs, hx = my_gru_forward(x, fused_params, HIDDEN, batch_first=False)
    outputs = jax.block_until_ready(outputs)
    hx = jax.block_until_ready(hx)

    ref_out, ref_hx = gru_reference(x, raw_params, HIDDEN, batch_first=False)
    assert outputs.shape == (SEQ, BATCH, HIDDEN)
    assert hx.shape == (LAYERS, BATCH, HIDDEN)
    assert jnp.allclose(outputs, ref_out, atol=2e-5, rtol=2e-5)
    assert jnp.allclose(hx, ref_hx, atol=2e-5, rtol=2e-5)

    print("KERNEL_OK")
</pallas_src>

<mosaic_0001>
module attributes {stable_mosaic.version = 11 : i64} {
  func.func @proj_kernel(%arg0: memref<32x16xf32, #tpu.memory_space<vmem>>, %arg1: memref<16x96xf32, #tpu.memory_space<vmem>>, %arg2: memref<1x96xf32, #tpu.memory_space<vmem>>, %arg3: memref<32x96xf32, #tpu.memory_space<vmem>>) attributes {dimension_semantics = [], scalar_prefetch = 0 : i64, scratch_operands = 0 : i64, tpu.core_type = #tpu.core_type<tc>} {
    %c0 = arith.constant 0 : index
    %c0_0 = arith.constant 0 : index
    %0 = vector.load %arg0[%c0, %c0_0] : memref<32x16xf32, #tpu.memory_space<vmem>>, vector<32x16xf32>
    %c0_1 = arith.constant 0 : index
    %c0_2 = arith.constant 0 : index
    %1 = vector.load %arg1[%c0_1, %c0_2] : memref<16x96xf32, #tpu.memory_space<vmem>>, vector<16x96xf32>
    %cst = arith.constant dense<0.000000e+00> : vector<32x96xf32>
    %2 = tpu.matmul %0, %1, %cst {dimension_numbers = #tpu.dot_dimension_numbers<[1], [0], [0], [1], [0, 0, 1, 1], [], []>} : vector<32x16xf32>, vector<16x96xf32>, vector<32x96xf32> -> vector<32x96xf32>
    %c0_3 = arith.constant 0 : index
    %c0_4 = arith.constant 0 : index
    %3 = vector.load %arg2[%c0_3, %c0_4] : memref<1x96xf32, #tpu.memory_space<vmem>>, vector<1x96xf32>
    %4 = vector.broadcast %3 : vector<1x96xf32> to vector<32x96xf32>
    %5 = arith.addf %2, %4 : vector<32x96xf32>
    %c0_5 = arith.constant 0 : index
    %c0_6 = arith.constant 0 : index
    %6 = vector.load %arg3[%c0_5, %c0_6] : memref<32x96xf32, #tpu.memory_space<vmem>>, vector<32x96xf32>
    tpu.vector_store %arg3[%c0_5, %c0_6], %5 {strides = array<i32>} : memref<32x96xf32, #tpu.memory_space<vmem>>, vector<32x96xf32>,
    return
  }
}

</mosaic_0001>

<llo_original>
// kernel: tpu_custom_call.1
$region0: #{tpu_custom_call.1}
  #allocation0 [shape = 'u32[]', space=smem, size = 0x4, offset = 0x4, fixed_abs, tag = 'smem constant byte address 0x4 - core index']
  #allocation1 [shape = 'u32[144,128]{1,0:T(1,128)}', space=vmem, size = 0x12000, scoped, tag = 'internal scratch']
  %s0 = inlined_call_operand.vmem [shape: f32[32,16], index: 0, kind: input, shape index: {}]
  %s1 = inlined_call_operand.vmem [shape: f32[16,96], index: 1, kind: input, shape index: {}]
  %s2 = inlined_call_operand.vmem [shape: f32[1,96], index: 2, kind: input, shape index: {}]
  %s3 = inlined_call_operand.hbm [shape: f32[32,96], index: 3, kind: output, shape index: {}]
  %s4 = sld [smem:[#allocation0]]
  $region22: #{tpu_custom_call.1} parent=0
    _
  %s6 = ssub.s32 1, %s4
  %s7 = scalar_select 0, %s6, %s4
  $region1: #{tpu_custom_call.1} parent=0
    #allocation2 [shape = 'u8[16384]{0}', space=vmem, size = 0x4000, scoped, tag = 'output window, operand 0, single buffered']
    #allocation3 [shape = 's32[1]{0}', space=sflag, size = 0x4, scoped, tag = 'scoped memory for tpu_custom_call.1']
    %8 = vsyncpa [#allocation3], 0
    // Predicated region
    $region2: #{tpu_custom_call.1} parent=1 // pred_check
      _
    $region3: #{tpu_custom_call.1} parent=1 // pred_check_branch
      %10 = sbr.rel (0) target = $region5
    $region4: #{tpu_custom_call.1} parent=1 // pred_region
      _
    $region5: #{tpu_custom_call.1} parent=1 // pred_fallthru
      _
    // Predicated region
    $region6: #{tpu_custom_call.1} parent=1 // pred_check
      _
    $region7: #{tpu_custom_call.1} parent=1 // pred_check_branch
      %12 = sbr.rel (0) target = $region9
    $region8: #{tpu_custom_call.1} parent=1 // pred_region
      _
    $region9: #{tpu_custom_call.1} parent=1 // pred_fallthru
      _
    // Predicated region
    $region10: #{tpu_custom_call.1} parent=1 // pred_check
      _
    $region11: #{tpu_custom_call.1} parent=1 // pred_check_branch
      %14 = sbr.rel (0) target = $region13
    $region12: #{tpu_custom_call.1} parent=1 // pred_region
      _
    $region13: #{tpu_custom_call.1} parent=1 // pred_fallthru
      _
    %v15 = vld [vmem:[%s0] sm:$0xff]
    %v16 = vld [vmem:[%s0 + $0x8] sm:$0xff]
    %v17 = vld [vmem:[%s0 + $0x10] sm:$0xff]
    %v18 = vld [vmem:[%s0 + $0x18] sm:$0xff]
    %v19 = vld [vmem:[%s1] sm:$0xff]
    %v20 = vld [vmem:[%s1 + $0x8] sm:$0xff]
    %v21 = vld [vmem:[%s2] sm:$0x1]
    %v23 = vlaneseq
    %v24 = vshrl.u32 %v23, 7
    %v25 = vsub.s32 0, %v24
    %v26 = vrot.slane %v21, %v25
    %vm28 = vcmask 130048
    %v30 = vsel %vm28, %v15, 0
    %v33 = vsel %vm28, %v16, 0
    %v36 = vsel %vm28, %v17, 0
    %v39 = vsel %vm28, %v18, 0
    %41 = vmatprep.subr.mxu0 0.0
    %42 = vmatpush1.msra.mxu0 0.0
    %43 = vmatprep.subr.mxu0 0.0
    %44 = vmatpush1.msra.mxu0 0.0
    %45 = vmatprep.subr.mxu0 0.0
    %46 = vmatpush1.msra.mxu0 0.0
    %47 = vmatprep.subr.mxu0 0.0
    %48 = vmatpush1.msra.mxu0 0.0
    %49 = vmatprep.subr.mxu0 0.0
    %50 = vmatpush1.msra.mxu0 0.0
    %51 = vmatprep.subr.mxu0 0.0
    %52 = vmatpush1.msra.mxu0 0.0
    %53 = vmatprep.subr.mxu0 0.0
    %54 = vmatpush1.msra.mxu0 0.0
    %55 = vmatprep.subr.mxu0 0.0
    %56 = vmatpush1.msra.mxu0 0.0
    %57 = vmatprep.subr.mxu0 0.0
    %58 = vmatpush1.msra.mxu0 0.0
    %59 = vmatprep.subr.mxu0 0.0
    %60 = vmatpush1.msra.mxu0 0.0
    %61 = vmatprep.subr.mxu0 0.0
    %62 = vmatpush1.msra.mxu0 0.0
    %63 = vmatprep.subr.mxu0 0.0
    %64 = vmatpush1.msra.mxu0 0.0
    %65 = vmatprep.subr.mxu0 0.0
    %66 = vmatpush1.msra.mxu0 0.0
    %67 = vmatprep.subr.mxu0 0.0
    %68 = vmatpush1.msra.mxu0 0.0
    %69 = vmatprep.subr.mxu0 0.0
    %70 = vmatpush1.msra.mxu0 %v20
    %71 = vmatprep.subr.mxu0 0.0
    %72 = vmatpush1.msra.mxu0 %v19
    %73 = vmatprep.subr.mxu0 0.0
    %74 = vmatpush2.msra.mxu0 0.0
    %75 = vmatprep.subr.mxu0 0.0
    %76 = vmatpush2.msra.mxu0 0.0
    %77 = vmatprep.subr.mxu0 0.0
    %78 = vmatpush2.msra.mxu0 0.0
    %79 = vmatprep.subr.mxu0 0.0
    %80 = vmatpush2.msra.mxu0 0.0
    %81 = vmatprep.subr.mxu0 0.0
    %82 = vmatpush2.msra.mxu0 0.0
    %83 = vmatprep.subr.mxu0 0.0
    %84 = vmatpush2.msra.mxu0 0.0
    %85 = vmatprep.subr.mxu0 0.0
    %86 = vmatpush2.msra.mxu0 0.0
    %87 = vmatprep.subr.mxu0 0.0
    %88 = vmatpush2.msra.mxu0 0.0
    %89 = vmatprep.subr.mxu0 0.0
    %90 = vmatpush2.msra.mxu0 0.0
    %91 = vmatprep.subr.mxu0 0.0
    %92 = vmatpush2.msra.mxu0 0.0
    %93 = vmatprep.subr.mxu0 0.0
    %94 = vmatpush2.msra.mxu0 0.0
    %95 = vmatprep.subr.mxu0 0.0
    %96 = vmatpush2.msra.mxu0 0.0
    %97 = vmatprep.subr.mxu0 0.0
    %98 = vmatpush2.msra.mxu0 0.0
    %99 = vmatprep.subr.mxu0 0.0
    %100 = vmatpush2.msra.mxu0 0.0
    %101 = vmatprep.subr.mxu0 0.0
    %102 = vmatpush2.msra.mxu0 0.0
    %103 = vmatprep.subr.mxu0 0.0
    %104 = vmatpush2.msra.mxu0 0.0
    %105 = vmatprep.mubr.f32.mxu0 0.0
    %106 = vmatmul.mubr.f32.gmra.mxu0 %v30
    %v107 = vpop.f32.mrf.mxu0
    %v108 = vadd.f32 %v26, %v107
    %v109 = vpop.f32.mrf.mxu0
    %110 = vmatprep.mubr.f32.mxu0 0.0
    %111 = vmatmul.mubr.f32.gmra.mxu0 %v33
    %v112 = vpop.f32.mrf.mxu0
    %v113 = vadd.f32 %v26, %v112
    %v114 = vpop.f32.mrf.mxu0
    %115 = vmatprep.mubr.f32.mxu0 0.0
    %116 = vmatmul.mubr.f32.gmra.mxu0 %v36
    %v117 = vpop.f32.mrf.mxu0
    %v118 = vadd.f32 %v26, %v117
    %v119 = vpop.f32.mrf.mxu0
    %120 = vmatprep.mubr.f32.mxu0 0.0
    %121 = vmatmul.mubr.f32.gmra.mxu0 %v39
    %v122 = vpop.f32.mrf.mxu0
    %v123 = vadd.f32 %v26, %v122
    %v124 = vpop.f32.mrf.mxu0
    %125 = vdwg.mxu0
    %vm126 = vcmask 785408
    %127 = vst.msk [vmem:[#allocation2] sm:$0xff] %vm126, %v108
    %128 = vst.msk [vmem:[#allocation2 + $0x8] sm:$0xff] %vm126, %v113
    %129 = vst.msk [vmem:[#allocation2 + $0x10] sm:$0xff] %vm126, %v118
    %130 = vst.msk [vmem:[#allocation2 + $0x18] sm:$0xff] %vm126, %v123
    // Predicated region
    $region14: #{tpu_custom_call.1} parent=1 // pred_check
      _
    $region15: #{tpu_custom_call.1} parent=1 // pred_check_branch
      %132 = sbr.rel (0) target = $region17
    $region16: #{tpu_custom_call.1} parent=1 // pred_region
      %s134 = ssub.s32 512, 512
      %135 = vsyncadd [#allocation3], %s134
      %s136 = sshll.u32 [#allocation2], 4
      %s137 = int_to_ptr.vmem [resolvable:$true] %s136
      %142 = dma.vmem_to_hbm [thread:$0]  %s137, 512, %s3, [#allocation3], 128, 128, 8
    $region17: #{tpu_custom_call.1} parent=1 // pred_fallthru
      _
    // Predicated region
    $region18: #{tpu_custom_call.1} parent=1 // pred_check
      _
    $region19: #{tpu_custom_call.1} parent=1 // pred_check_branch
      %144 = sbr.rel (0) target = $region21
    $region20: #{tpu_custom_call.1} parent=1 // pred_region
      %145 = dma.done [#allocation3], 512
    $region21: #{tpu_custom_call.1} parent=1 // pred_fallthru
      _
    %146 = vsyncpa [#allocation3], 1

</llo_original>
